<compile_context>
chip_gen: v6e
topology: v6e:2x2x1
jax: 0.10.0
libtpu: 0.0.40
codegen_flags: <defaults>
</compile_context>

<pallas_src>
import jax
import jax.numpy as jnp
from jax.experimental import pallas as pl
from jax.experimental.pallas import tpu as pltpu


def _round_up(x, m):
    return (x + m - 1) // m * m


def _cdiv(a, b):
    return (a + b - 1) // b


def _label_attn_kernel(dots_ref, xsum_ref, out_ref):
    # dots_ref: (1, tS, L)   f32  <label_l, lstm[b, s, :]> for this S-tile
    # xsum_ref: (1, 1, D)    f32  sum_t lstm[b, t, :] for this batch element
    # out_ref:  (1, L, tS, D)     weighted_output block (cast only at store)
    d = dots_ref[0]                                    # (tS, L)

    # Softmax over the label axis (dim=1 of the stacked torch tensor).
    m = jnp.max(d, axis=-1, keepdims=True)             # (tS, 1)
    e = jnp.exp(d - m)                                 # (tS, L)
    denom = jnp.sum(e, axis=-1, keepdims=True)         # (tS, 1)
    # Exact reciprocal: kernel is HBM-write-bound, exact is effectively free.
    w = e * pl.reciprocal(denom, approx=False)         # (tS, L)

    xs = xsum_ref[0]                                   # (1, D)
    num_labels = w.shape[-1]
    # Static unroll over labels (L is a static shape, typically small).  The
    # S-tile sits on sublanes of w, so w[:, l:l+1] * xs is the standard
    # column-splat broadcast against the lane-dense D axis — no relayout.
    # TODO(synk): for very large L, switch this unroll to a fori_loop.
    for l in range(num_labels):
        out_ref[0, l] = (w[:, l:l + 1] * xs).astype(out_ref.dtype)


def _plan(B, S, L, D_pad, out_itemsize):
    """Pick the S-tile, grid extent, padded S and a VMEM limit."""
    try:
        vmem_cap = pltpu.get_tpu_info().vmem_capacity_bytes
    except Exception:  # non-TPU tracing fallback
        vmem_cap = 64 << 20
    # Never more than ~3/4 of VMEM resident; hard cap 48 MiB so the plan also
    # fits v7x's 64 MiB per-TensorCore VMEM.
    resident_cap = min(48 << 20, (vmem_cap * 3) // 4)

    s8 = _round_up(S, 8)
    out_row_bytes = L * D_pad * out_itemsize                # one S-row of out blk
    small_bytes = 2 * (s8 * _round_up(L, 128) * 4 + 8 * D_pad * 4)
    # ~8-12 MiB output blocks amortize the ~0.35us/step overhead; budget the
    # double-buffered pair of output blocks against the resident cap.
    out_block_budget = min(12 << 20,
                           max(8 * out_row_bytes, (resident_cap - small_bytes) // 2))
    tS = min(s8, max(8, (out_block_budget // out_row_bytes) // 8 * 8))

    # v7x megacore: with an odd batch try to keep the S-tile count even so the
    # parallel grid splits evenly across the 2 TensorCores.
    if B % 2 == 1:
        while _cdiv(S, tS) % 2 == 1 and tS % 16 == 0 and tS >= 16:
            tS //= 2

    n_s = _cdiv(S, tS)
    S_pad = n_s * tS

    out_blk = L * tS * D_pad * out_itemsize
    dots_blk = tS * _round_up(L, 128) * 4
    xsum_blk = 8 * D_pad * 4
    resident = 2 * (out_blk + dots_blk + xsum_blk)
    vmem_limit = int(min(resident_cap, max(16 << 20, resident + (2 << 20))))
    return tS, n_s, S_pad, vmem_limit


def label_attention_layer(lstm_output, label_vecs, hidden_dim,
                          out_dtype=jnp.bfloat16):
    """Forward of LabelAttentionLayer. Returns (B, L*S, 2*hidden_dim)."""
    B, S, D = lstm_output.shape
    L, Dl = label_vecs.shape
    assert Dl == D and D == 2 * hidden_dim

    lstm_f32 = lstm_output.astype(jnp.float32)
    labels_f32 = label_vecs.astype(jnp.float32)

    # Stage 1 in plain XLA (single fused pass over lstm_output; its outputs
    # are tiny vs. the (B,L,S,D) write the kernel does, and this removes one
    # whole HBM read of lstm_output from the Pallas kernel):
    #   dots[b, s, l] = <lstm[b, s, :], label_l>   (the per-label bmm scores)
    #   xsum[b, d]    = sum_t lstm[b, t, d]        (rank-1 factor of stage 2)
    dots = jnp.einsum("bsd,ld->bsl", lstm_f32, labels_f32,
                      preferred_element_type=jnp.float32)            # (B, S, L)
    xsum = jnp.sum(lstm_f32, axis=1, dtype=jnp.float32)[:, None, :]  # (B, 1, D)

    # Lane-dense output: pad D to a multiple of 128 (avoids masked vst.msk
    # partial stores on the dominant write path).
    D_pad = _round_up(D, 128)
    if D_pad != D:
        xsum = jnp.pad(xsum, ((0, 0), (0, 0), (0, D_pad - D)))

    out_itemsize = jnp.dtype(out_dtype).itemsize
    tS, n_s, S_pad, vmem_limit = _plan(B, S, L, D_pad, out_itemsize)
    if S_pad != S:
        dots = jnp.pad(dots, ((0, 0), (0, S_pad - S), (0, 0)))

    cost = pl.CostEstimate(
        flops=B * S_pad * L * (D_pad + 3),               # rank-1 mul + softmax
        transcendentals=B * S_pad * L,                   # exp
        bytes_accessed=(4 * B * S_pad * L + 4 * B * D_pad
                        + out_itemsize * B * L * S_pad * D_pad),
    )

    weighted = pl.pallas_call(
        _label_attn_kernel,
        out_shape=jax.ShapeDtypeStruct((B, L, S_pad, D_pad), out_dtype),
        grid_spec=pltpu.PrefetchScalarGridSpec(
            num_scalar_prefetch=0,
            grid=(B, n_s),
            in_specs=[
                pl.BlockSpec((1, tS, L), lambda b, s: (b, s, 0)),
                pl.BlockSpec((1, 1, D_pad), lambda b, s: (b, 0, 0)),
            ],
            out_specs=pl.BlockSpec((1, L, tS, D_pad), lambda b, s: (b, 0, s, 0)),
        ),
        compiler_params=pltpu.CompilerParams(
            dimension_semantics=("parallel", "parallel"),
            vmem_limit_bytes=vmem_limit),
        cost_estimate=cost,
    )(dots, xsum)

    if S_pad != S or D_pad != D:
        weighted = weighted[:, :, :S, :D]

    # Final branch of the torch forward (taken since D == 2*hidden_dim):
    # view(B, -1, 2, h) + cat([..,0,:], [..,1,:]) is an identity permutation
    # of the D axis, so a plain (free) reshape suffices.
    return weighted.reshape(B, L * S, D)


def _reference(lstm_output, label_vecs, hidden_dim):
    # Pure-JAX mirror of the (fixed) PyTorch forward, for correctness check.
    B, S, D = lstm_output.shape
    L = label_vecs.shape[0]
    dots = jnp.einsum("bsd,ld->bls", lstm_output, label_vecs)       # (B, L, S)
    scores = jnp.broadcast_to(dots[:, :, :, None], (B, L, S, S))    # (B, L, S, S)
    w = jax.nn.softmax(scores, axis=1)                              # over labels
    weighted = jnp.einsum("blst,btd->blsd", w, lstm_output)         # (B, L, S, D)
    wr = weighted.reshape(B, -1, 2, hidden_dim)
    return jnp.concatenate([wr[:, :, 0, :], wr[:, :, 1, :]], axis=-1)


if __name__ == "__main__":
    hidden_dim = 64
    B, S, L = 2, 8, 4
    D = 2 * hidden_dim

    key = jax.random.PRNGKey(0)
    k_lstm, k_lab = jax.random.split(key)
    lstm_output = jax.random.normal(k_lstm, (B, S, D), dtype=jnp.float32)
    # Deterministic "parameters": L label vectors of dim D (synthetic init).
    label_vecs = jax.random.normal(k_lab, (L, D), dtype=jnp.float32)

    ref = _reference(lstm_output, label_vecs, hidden_dim)

    # Default path: bf16 output (halves the dominant HBM write traffic).
    out_bf16 = label_attention_layer(lstm_output, label_vecs, hidden_dim)
    out_bf16 = jax.block_until_ready(out_bf16)
    assert out_bf16.shape == (B, L * S, D), out_bf16.shape
    assert out_bf16.dtype == jnp.bfloat16
    assert jnp.allclose(out_bf16.astype(jnp.float32), ref, atol=5e-2, rtol=5e-2), \
        "bf16 output mismatch vs reference"

    # f32 path: exact softmax reciprocal -> tight tolerance vs reference.
    out_f32 = label_attention_layer(lstm_output, label_vecs, hidden_dim,
                                    out_dtype=jnp.float32)
    out_f32 = jax.block_until_ready(out_f32)
    assert out_f32.shape == (B, L * S, D), out_f32.shape
    assert jnp.allclose(out_f32, ref, atol=1e-4, rtol=1e-4), \
        "f32 output mismatch vs reference"

    print("KERNEL_OK")
</pallas_src>

<mosaic_0001>
module attributes {stable_mosaic.version = 11 : i64} {
  func.func @_label_attn_kernel(%arg0: i32, %arg1: i32, %arg2: memref<1x8x4xf32, #tpu.memory_space<vmem>>, %arg3: memref<1x1x128xf32, #tpu.memory_space<vmem>>, %arg4: memref<1x4x8x128xbf16, #tpu.memory_space<vmem>>) attributes {dimension_semantics = [#tpu.dimension_semantics<parallel>, #tpu.dimension_semantics<parallel>], iteration_bounds = array<i64: 2, 1>, scalar_prefetch = 0 : i64, scratch_operands = 0 : i64, tpu.core_type = #tpu.core_type<tc>, window_params = [{transform_indices = @transform_0, window_bounds = array<i64: 1, 8, 4>}, {transform_indices = @transform_1, window_bounds = array<i64: 1, 1, 128>}, {transform_indices = @transform_2, window_bounds = array<i64: 1, 4, 8, 128>}]} {
    %c0 = arith.constant 0 : index
    %c0_0 = arith.constant 0 : index
    %c0_1 = arith.constant 0 : index
    %0 = vector.load %arg2[%c0, %c0_0, %c0_1] : memref<1x8x4xf32, #tpu.memory_space<vmem>>, vector<1x8x4xf32>
    %1 = vector.shape_cast %0 : vector<1x8x4xf32> to vector<8x4xf32>
    %cst = arith.constant dense<0xFF800000> : vector<8xf32>
    %2 = vector.multi_reduction <maximumf>, %1, %cst [1] : vector<8x4xf32> to vector<8xf32>
    %3 = vector.shape_cast %2 : vector<8xf32> to vector<8x1xf32>
    %4 = vector.broadcast %3 : vector<8x1xf32> to vector<8x4xf32>
    %5 = arith.subf %1, %4 : vector<8x4xf32>
    %6 = math.exp %5 : vector<8x4xf32>
    %cst_2 = arith.constant dense<0.000000e+00> : vector<8xf32>
    %7 = vector.multi_reduction <add>, %6, %cst_2 [1] : vector<8x4xf32> to vector<8xf32>
    %8 = vector.shape_cast %7 : vector<8xf32> to vector<8x1xf32>
    %9 = tpu.reciprocal %8 : vector<8x1xf32> -> vector<8x1xf32>
    %10 = vector.broadcast %9 : vector<8x1xf32> to vector<8x4xf32>
    %11 = arith.mulf %6, %10 : vector<8x4xf32>
    %c0_3 = arith.constant 0 : index
    %c0_4 = arith.constant 0 : index
    %c0_5 = arith.constant 0 : index
    %12 = vector.load %arg3[%c0_3, %c0_4, %c0_5] : memref<1x1x128xf32, #tpu.memory_space<vmem>>, vector<1x1x128xf32>
    %13 = vector.shape_cast %12 : vector<1x1x128xf32> to vector<1x128xf32>
    %14 = vector.extract_strided_slice %11 {offsets = [0, 0], sizes = [8, 1], strides = [1, 1]} : vector<8x4xf32> to vector<8x1xf32>
    %15 = vector.broadcast %14 : vector<8x1xf32> to vector<8x128xf32>
    %16 = vector.broadcast %13 : vector<1x128xf32> to vector<8x128xf32>
    %17 = arith.mulf %15, %16 : vector<8x128xf32>
    %18 = arith.truncf %17 : vector<8x128xf32> to vector<8x128xbf16>
    %c0_6 = arith.constant 0 : index
    %c0_7 = arith.constant 0 : index
    %c0_8 = arith.constant 0 : index
    %c0_9 = arith.constant 0 : index
    %19 = vector.load %arg4[%c0_6, %c0_7, %c0_8, %c0_9] : memref<1x4x8x128xbf16, #tpu.memory_space<vmem>>, vector<1x1x8x128xbf16>
    %20 = vector.shape_cast %19 : vector<1x1x8x128xbf16> to vector<8x128xbf16>
    %21 = vector.shape_cast %18 : vector<8x128xbf16> to vector<1x1x8x128xbf16>
    tpu.vector_store %arg4[%c0_6, %c0_7, %c0_8, %c0_9], %21 {strides = array<i32>} : memref<1x4x8x128xbf16, #tpu.memory_space<vmem>>, vector<1x1x8x128xbf16>,
    %22 = vector.extract_strided_slice %11 {offsets = [0, 1], sizes = [8, 1], strides = [1, 1]} : vector<8x4xf32> to vector<8x1xf32>
    %23 = vector.broadcast %22 : vector<8x1xf32> to vector<8x128xf32>
    %24 = vector.broadcast %13 : vector<1x128xf32> to vector<8x128xf32>
    %25 = arith.mulf %23, %24 : vector<8x128xf32>
    %26 = arith.truncf %25 : vector<8x128xf32> to vector<8x128xbf16>
    %c0_10 = arith.constant 0 : index
    %c1 = arith.constant 1 : index
    %c0_11 = arith.constant 0 : index
    %c0_12 = arith.constant 0 : index
    %27 = vector.load %arg4[%c0_10, %c1, %c0_11, %c0_12] : memref<1x4x8x128xbf16, #tpu.memory_space<vmem>>, vector<1x1x8x128xbf16>
    %28 = vector.shape_cast %27 : vector<1x1x8x128xbf16> to vector<8x128xbf16>
    %29 = vector.shape_cast %26 : vector<8x128xbf16> to vector<1x1x8x128xbf16>
    tpu.vector_store %arg4[%c0_10, %c1, %c0_11, %c0_12], %29 {strides = array<i32>} : memref<1x4x8x128xbf16, #tpu.memory_space<vmem>>, vector<1x1x8x128xbf16>,
    %30 = vector.extract_strided_slice %11 {offsets = [0, 2], sizes = [8, 1], strides = [1, 1]} : vector<8x4xf32> to vector<8x1xf32>
    %31 = vector.broadcast %30 : vector<8x1xf32> to vector<8x128xf32>
    %32 = vector.broadcast %13 : vector<1x128xf32> to vector<8x128xf32>
    %33 = arith.mulf %31, %32 : vector<8x128xf32>
    %34 = arith.truncf %33 : vector<8x128xf32> to vector<8x128xbf16>
    %c0_13 = arith.constant 0 : index
    %c2 = arith.constant 2 : index
    %c0_14 = arith.constant 0 : index
    %c0_15 = arith.constant 0 : index
    %35 = vector.load %arg4[%c0_13, %c2, %c0_14, %c0_15] : memref<1x4x8x128xbf16, #tpu.memory_space<vmem>>, vector<1x1x8x128xbf16>
    %36 = vector.shape_cast %35 : vector<1x1x8x128xbf16> to vector<8x128xbf16>
    %37 = vector.shape_cast %34 : vector<8x128xbf16> to vector<1x1x8x128xbf16>
    tpu.vector_store %arg4[%c0_13, %c2, %c0_14, %c0_15], %37 {strides = array<i32>} : memref<1x4x8x128xbf16, #tpu.memory_space<vmem>>, vector<1x1x8x128xbf16>,
    %38 = vector.extract_strided_slice %11 {offsets = [0, 3], sizes = [8, 1], strides = [1, 1]} : vector<8x4xf32> to vector<8x1xf32>
    %39 = vector.broadcast %38 : vector<8x1xf32> to vector<8x128xf32>
    %40 = vector.broadcast %13 : vector<1x128xf32> to vector<8x128xf32>
    %41 = arith.mulf %39, %40 : vector<8x128xf32>
    %42 = arith.truncf %41 : vector<8x128xf32> to vector<8x128xbf16>
    %c0_16 = arith.constant 0 : index
    %c3 = arith.constant 3 : index
    %c0_17 = arith.constant 0 : index
    %c0_18 = arith.constant 0 : index
    %43 = vector.load %arg4[%c0_16, %c3, %c0_17, %c0_18] : memref<1x4x8x128xbf16, #tpu.memory_space<vmem>>, vector<1x1x8x128xbf16>
    %44 = vector.shape_cast %43 : vector<1x1x8x128xbf16> to vector<8x128xbf16>
    %45 = vector.shape_cast %42 : vector<8x128xbf16> to vector<1x1x8x128xbf16>
    tpu.vector_store %arg4[%c0_16, %c3, %c0_17, %c0_18], %45 {strides = array<i32>} : memref<1x4x8x128xbf16, #tpu.memory_space<vmem>>, vector<1x1x8x128xbf16>,
    return
  }
  func.func @transform_0(%arg0: i32, %arg1: i32) -> (i32, i32, i32) {
    %c0_i32 = arith.constant 0 : i32
    %c0_i32_0 = arith.constant 0 : i32
    return %arg0, %arg1, %c0_i32 : i32, i32, i32
  }
  func.func @transform_1(%arg0: i32, %arg1: i32) -> (i32, i32, i32) {
    %c0_i32 = arith.constant 0 : i32
    %c0_i32_0 = arith.constant 0 : i32
    %c0_i32_1 = arith.constant 0 : i32
    return %arg0, %c0_i32, %c0_i32_0 : i32, i32, i32
  }
  func.func @transform_2(%arg0: i32, %arg1: i32) -> (i32, i32, i32, i32) {
    %c0_i32 = arith.constant 0 : i32
    %c0_i32_0 = arith.constant 0 : i32
    %c0_i32_1 = arith.constant 0 : i32
    return %arg0, %c0_i32, %arg1, %c0_i32_0 : i32, i32, i32, i32
  }
}

</mosaic_0001>

<llo_original>
// kernel: tpu_custom_call.1
$region0: #{tpu_custom_call.1}
  #allocation0 [shape = 'u32[]', space=smem, size = 0x4, offset = 0x4, fixed_abs, tag = 'smem constant byte address 0x4 - core index']
  #allocation1 [shape = 'u32[144,128]{1,0:T(1,128)}', space=vmem, size = 0x12000, scoped, tag = 'internal scratch']
  %s0 = inlined_call_operand.vmem [shape: f32[2,8,4], index: 0, kind: input, shape index: {}]
  %s1 = inlined_call_operand.vmem [shape: f32[2,1,128], index: 1, kind: input, shape index: {}]
  %s2 = inlined_call_operand.hbm [shape: bf16[2,4,8,128], index: 2, kind: output, shape index: {}]
  %s3 = sld [smem:[#allocation0]]
  $region41: #{tpu_custom_call.1} parent=0
    _
  %s5 = ssub.s32 1, %s3
  %s6 = scalar_select 0, %s5, %s3
  $region1: #{tpu_custom_call.1} parent=0
    #allocation2 [shape = 'u8[16384]{0}', space=vmem, size = 0x4000, scoped, tag = 'output window, operand 0']
    #allocation3 [shape = 's32[2]{0}', space=sflag, size = 0x8, scoped, tag = 'scoped memory for tpu_custom_call.1']
    %7 = vsyncpa [#allocation3], 0
    %s8 = scalar_lea.sflag [#allocation3], 1
    %9 = vsyncpa %s8, 0
    loop: start=0, step=1, limit=4
    $region2: #{tpu_custom_call.1} parent=1 // loop_pre_header
      _
    $region3: #{tpu_custom_call.1} parent=1 // loop_header
      %s11 = sphi 0, %s15
      %p12 = scmp.ge.s32.totalorder %s11, 4
      %s18 = sphi 0, %s30
      %s19 = sphi 0, %s26
      %s20 = sphi 0, %s18
      %s21 = sphi 0, %s19
      %s22 = sphi 0, %s20
      %s23 = sphi 0, %s21
      %s35 = sphi 0, %s37
      %s38 = sphi 0, %s35
      %s39 = sphi 0, %s38
      %s55 = sphi 0, %s39
      %s61 = sphi 0, %s63
      %s64 = sphi 0, %s61
      %s65 = sphi 0, %s64
      %s81 = sphi 0, %s65
      %s89 = sphi 0, %s91
      %s92 = sphi 0, %s89
      %s93 = sphi 0, %s92
      %s109 = sphi 0, %s93
    $region4: #{tpu_custom_call.1} parent=1 // loop_header_branch
      %14 = sbr.rel (%p12) target = $region8
    $region5: #{tpu_custom_call.1} parent=1 // loop_body
      %s16 = ssub.s32 %s11, 1
      %s17 = ssub.s32 %s11, 2
      %s24 = sadd.s32 1, %s19
      %p25 = scmp.ge.s32.totalorder %s24, 1
      %s26 = scalar_select %p25, 0, %s24
      %s27 = sadd.s32 1, %s18
      %s28 = scalar_select %p25, %s27, %s18
      %p29 = scmp.ge.s32.totalorder %s28, 2
      %s30 = scalar_select %p29, 0, %s28
      %s31 = ssub.s32 %s18, %s30
      %s32 = ssub.s32 %s19, %s26
      %s33 = sor.u32 %s31, %s32
      %p34 = scmp.eq.s32.totalorder %s33, 0
      %s36 = sadd.s32 %s35, 1
      %s37 = scalar_select %p34, %s35, %s36
      %p40 = pneg %p34
      %p41 = scmp.eq.s32.totalorder %s11, 1
      %p42 = por %p40, %p41
      %p43 = scmp.ne.s32.totalorder %s35, %s38
      %p44 = scmp.eq.s32.totalorder %s11, 0
      %p45 = por %p43, %p44
      %p46 = scmp.ne.s32.totalorder %s35, %s38
      %p47 = scmp.eq.s32.totalorder %s16, 1
      %p48 = por %p46, %p47
      %p49 = scmp.ne.s32.totalorder %s38, %s39
      %p50 = scmp.eq.s32.totalorder %s16, 0
      %p51 = por %p49, %p50
      %p52 = scmp.ne.s32.totalorder %s38, %s39
      %p53 = scmp.eq.s32.totalorder %s17, 1
      %p54 = por %p52, %p53
      %p56 = scmp.ne.s32.totalorder %s39, %s55
      %p57 = scmp.eq.s32.totalorder %s17, 0
      %p58 = por %p56, %p57
      %s59 = ssub.s32 %s18, %s30
      %p60 = scmp.eq.s32.totalorder %s59, 0
      %s62 = sadd.s32 %s61, 1
      %s63 = scalar_select %p60, %s61, %s62
      %p66 = pneg %p60
      %p67 = scmp.eq.s32.totalorder %s11, 1
      %p68 = por %p66, %p67
      %p69 = scmp.ne.s32.totalorder %s61, %s64
      %p70 = scmp.eq.s32.totalorder %s11, 0
      %p71 = por %p69, %p70
      %p72 = scmp.ne.s32.totalorder %s61, %s64
      %p73 = scmp.eq.s32.totalorder %s16, 1
      %p74 = por %p72, %p73
      %p75 = scmp.ne.s32.totalorder %s64, %s65
      %p76 = scmp.eq.s32.totalorder %s16, 0
      %p77 = por %p75, %p76
      %p78 = scmp.ne.s32.totalorder %s64, %s65
      %p79 = scmp.eq.s32.totalorder %s17, 1
      %p80 = por %p78, %p79
      %p82 = scmp.ne.s32.totalorder %s65, %s81
      %p83 = scmp.eq.s32.totalorder %s17, 0
      %p84 = por %p82, %p83
      %s85 = ssub.s32 %s18, %s30
      %s86 = ssub.s32 %s19, %s26
      %s87 = sor.u32 %s85, %s86
      %p88 = scmp.eq.s32.totalorder %s87, 0
      %s90 = sadd.s32 %s89, 1
      %s91 = scalar_select %p88, %s89, %s90
      %p94 = pneg %p88
      %p95 = scmp.eq.s32.totalorder %s11, 1
      %p96 = por %p94, %p95
      %p97 = scmp.ne.s32.totalorder %s89, %s92
      %p98 = scmp.eq.s32.totalorder %s11, 0
      %p99 = por %p97, %p98
      %p100 = scmp.ne.s32.totalorder %s89, %s92
      %p101 = scmp.eq.s32.totalorder %s16, 1
      %p102 = por %p100, %p101
      %p103 = scmp.ne.s32.totalorder %s92, %s93
      %p104 = scmp.eq.s32.totalorder %s16, 0
      %p105 = por %p103, %p104
      %p106 = scmp.ne.s32.totalorder %s92, %s93
      %p107 = scmp.eq.s32.totalorder %s17, 1
      %p108 = por %p106, %p107
      %p110 = scmp.ne.s32.totalorder %s93, %s109
      %p111 = scmp.eq.s32.totalorder %s17, 0
      %p112 = por %p110, %p111
      %p113 = scmp.le.s32.totalorder 1, %s11
      %p114 = scmp.lt.s32.totalorder %s11, 3
      %p115 = pnand %p113, %p114
      %p116 = pneg %p115
      // Predicated region
      $region9: #{tpu_custom_call.1} parent=5 // pred_check
        _
      $region10: #{tpu_custom_call.1} parent=5 // pred_check_branch
        %118 = sbr.rel (%p115) target = $region12
      $region11: #{tpu_custom_call.1} parent=5 // pred_region
        %s119 = ssub.s32 %s11, 1
      $region12: #{tpu_custom_call.1} parent=5 // pred_fallthru
        _
      %p120 = scmp.lt.s32.totalorder %s11, 2
      // Predicated region
      $region13: #{tpu_custom_call.1} parent=5 // pred_check
        %p121 = pneg %p120
      $region14: #{tpu_custom_call.1} parent=5 // pred_check_branch
        %123 = sbr.rel (%p121) target = $region16
      $region15: #{tpu_custom_call.1} parent=5 // pred_region
        // Predicated region
        $region17: #{tpu_custom_call.1} parent=15 // pred_check
          %p124 = pneg %p45
        $region18: #{tpu_custom_call.1} parent=15 // pred_check_branch
          %126 = sbr.rel (%p124) target = $region20
        $region19: #{tpu_custom_call.1} parent=15 // pred_region
          %p127 = scmp.lt.s32.totalorder %s18, 1
          %s128 = scalar_select %p127, %s18, 1
          %p129 = scmp.lt.s32.totalorder %s19, 0
          %s130 = scalar_select %p129, %s19, 0
          %s131 = sadd.s32 %s130, %s128
          %s132 = smul.addr %s131, 8
          %s133 = scalar_lea.vmem %s0, %s132
        $region20: #{tpu_custom_call.1} parent=15 // pred_fallthru
          _
        // Predicated region
        $region21: #{tpu_custom_call.1} parent=15 // pred_check
          %p134 = pneg %p71
        $region22: #{tpu_custom_call.1} parent=15 // pred_check_branch
          %136 = sbr.rel (%p134) target = $region24
        $region23: #{tpu_custom_call.1} parent=15 // pred_region
          %p137 = scmp.lt.s32.totalorder %s18, 1
          %s138 = scalar_select %p137, %s18, 1
          %s139 = scalar_lea.vmem %s1, %s138
        $region24: #{tpu_custom_call.1} parent=15 // pred_fallthru
          _
      $region16: #{tpu_custom_call.1} parent=5 // pred_fallthru
        _
      %p140 = scmp.le.s32.totalorder 1, %s11
      %p141 = scmp.lt.s32.totalorder %s11, 3
      %p142 = pnand %p140, %p141
      %p143 = pneg %p142
      // Predicated region
      $region25: #{tpu_custom_call.1} parent=5 // pred_check
        _
      $region26: #{tpu_custom_call.1} parent=5 // pred_check_branch
        %145 = sbr.rel (%p142) target = $region28
      $region27: #{tpu_custom_call.1} parent=5 // pred_region
        %s146 = ssub.s32 %s11, 1
        %p147 = scmp.lt.s32.totalorder %s20, 1
        %s148 = scalar_select %p147, %s20, 1
        %p149 = scmp.lt.s32.totalorder %s21, 0
        %s150 = scalar_select %p149, %s21, 0
        %s151 = sadd.s32 %s150, %s148
        %s152 = smul.addr %s151, 8
        %s153 = scalar_lea.vmem %s0, %s152
        %p154 = pneg %p51
        %p155 = pneg %p48
        %p156 = scmp.lt.s32.totalorder %s20, 1
        %s157 = scalar_select %p156, %s20, 1
        %s158 = scalar_lea.vmem %s1, %s157
        %p159 = pneg %p77
        %p160 = pneg %p74
        %p161 = pneg %p105
        %p162 = pneg %p102
        %s163 = sand.u32 %s92, 1
        %s164 = scalar_lea.sflag [#allocation3], %s163
        %s165 = sand.u32 %s92, 1
        %s166 = smul.addr %s165, 16
        %s167 = scalar_lea.vmem [#allocation2], %s166
        %p168 = scmp.lt.s32.totalorder %s20, 1
        %s169 = scalar_select %p168, %s20, 1
        %p170 = scmp.lt.s32.totalorder %s21, 0
        %s171 = scalar_select %p170, %s21, 0
        %s172 = sadd.s32 %s171, %s169
        %s173 = smul.addr %s172, 8
        %s174 = scalar_lea.vmem %s0, %s173
        %p175 = scmp.lt.s32.totalorder %s20, 1
        %s176 = scalar_select %p175, %s20, 1
        %s177 = scalar_lea.vmem %s1, %s176
        %v178 = vld [vmem:[%s174] sm:$0xff]
        %vm179 = vcmask 31744
        %v180 = vsel %vm179, %v178, -inf
        %181 = vmax.xlane.f32.xlu0 %v180
        %v182 = vpop.xlane.xlu0 %181
        %v183 = vsub.f32 %v178, %v182
        %v184 = vmul.f32 %v183, 1.442695
        %v185 = vpow.pop %v184
        %v186 = vsel %vm179, %v185, 0.0
        %187 = vadd.xlane.f32.xlu0 %v186
        %v188 = vpop.xlane.xlu0 %187
        %v189 = vrcp.pop %v188
        %v190 = vmul.f32 %v185, %v189
        %v191 = vld [vmem:[%s177] sm:$0x1]
        %193 = vset.pattern.permute.xlu0 0
        %194 = vperm.xlu0 %193, %v190
        %v195 = vpop.permute.xlu0 %194
        %v198 = vlaneseq
        %v199 = vshrl.u32 %v198, 7
        %v200 = vsub.s32 0, %v199
        %v201 = vrot.slane %v191, %v200
        %v203 = vmul.f32 %v195, %v201
        %v204 = vpack.c.bf16 %v203, %v203
        %205 = vst [vmem:[%s167] sm:$0xf] %v204
        %206 = vset.pattern.permute.xlu0 1
        %207 = vperm.xlu0 %206, %v190
        %v208 = vpop.permute.xlu0 %207
        %v210 = vmul.f32 %v208, %v201
        %v211 = vpack.c.bf16 %v210, %v210
        %s212 = scalar_lea.vmem %s167, 4 [#allocation2]
        %213 = vst [vmem:[%s212] sm:$0xf] %v211
        %214 = vset.pattern.permute.xlu0 2
        %215 = vperm.xlu0 %214, %v190
        %v216 = vpop.permute.xlu0 %215
        %v218 = vmul.f32 %v216, %v201
        %v219 = vpack.c.bf16 %v218, %v218
        %s220 = scalar_lea.vmem %s167, 8 [#allocation2]
        %221 = vst [vmem:[%s220] sm:$0xf] %v219
        %222 = vset.pattern.permute.xlu0 3
        %223 = vperm.xlu0 %222, %v190
        %v224 = vpop.permute.xlu0 %223
        %v226 = vmul.f32 %v224, %v201
        %v227 = vpack.c.bf16 %v226, %v226
        %s228 = scalar_lea.vmem %s167, 12 [#allocation2]
        %229 = vst [vmem:[%s228] sm:$0xf] %v227
        %s230 = sand.u32 %s92, 1
        %s231 = scalar_lea.sflag [#allocation3], %s230
        %s232 = sand.u32 %s92, 1
        %s233 = smul.addr %s232, 16
        %s234 = scalar_lea.vmem [#allocation2], %s233
        // Predicated region
        $region29: #{tpu_custom_call.1} parent=27 // pred_check
          %p235 = pneg %p102
        $region30: #{tpu_custom_call.1} parent=27 // pred_check_branch
          %237 = sbr.rel (%p235) target = $region32
        $region31: #{tpu_custom_call.1} parent=27 // pred_region
          %s239 = ssub.s32 256, 256
          %240 = vsyncadd %s231, %s239
          %s241 = smul.addr %s20, 4
          %s242 = sadd.s32 %s21, %s241
          %s243 = smul.addr %s242, 64
          %s244 = scalar_lea.hbm %s2, %s243
          %s245 = sshll.u32 %s234, 4
          %s246 = int_to_ptr.vmem [resolvable:$true] %s245
          %251 = dma.vmem_to_hbm [thread:$0]  %s246, 256, %s244, %s231, 64, 64, 4
        $region32: #{tpu_custom_call.1} parent=27 // pred_fallthru
          _
      $region28: #{tpu_custom_call.1} parent=5 // pred_fallthru
        _
      %p252 = scmp.le.s32.totalorder 2, %s11
      // Predicated region
      $region33: #{tpu_custom_call.1} parent=5 // pred_check
        %p253 = pneg %p252
      $region34: #{tpu_custom_call.1} parent=5 // pred_check_branch
        %255 = sbr.rel (%p253) target = $region36
      $region35: #{tpu_custom_call.1} parent=5 // pred_region
        %s256 = ssub.s32 %s11, 2
        // Predicated region
        $region37: #{tpu_custom_call.1} parent=35 // pred_check
          %p257 = pneg %p108
        $region38: #{tpu_custom_call.1} parent=35 // pred_check_branch
          %259 = sbr.rel (%p257) target = $region40
        $region39: #{tpu_custom_call.1} parent=35 // pred_region
          %s260 = sand.u32 %s93, 1
          %s261 = scalar_lea.sflag [#allocation3], %s260
          %s262 = sand.u32 %s93, 1
          %s263 = smul.addr %s262, 16
          %s264 = scalar_lea.vmem [#allocation2], %s263
          %265 = dma.done %s261, 256
        $region40: #{tpu_custom_call.1} parent=35 // pred_fallthru
          _
      $region36: #{tpu_custom_call.1} parent=5 // pred_fallthru
        _
    $region6: #{tpu_custom_call.1} parent=1 // loop_footer
      %s15 = sadd.s32 1, %s11
    $region7: #{tpu_custom_call.1} parent=1 // loop_footer_branch
      %10 = sbr.rel target = $region3
    $region8: #{tpu_custom_call.1} parent=1 // loop_exit
      _
    %266 = vsyncpa [#allocation3], 1
    %s267 = scalar_lea.sflag [#allocation3], 1
    %268 = vsyncpa %s267, 1

</llo_original>
